<compile_context>
chip_gen: v7x
topology: tpu7x:2x2x1
jax: 0.10.0
libtpu: 0.0.40
codegen_flags: <defaults>
</compile_context>

<pallas_src>
import functools
import warnings

import jax
import jax.numpy as jnp
import numpy as np
from jax.experimental import pallas as pl
from jax.experimental.pallas import tpu as pltpu

# Cost weights hard-coded in the PyTorch __init__ (the ctor args are overridden).
COST_CLASS = 1.0
COST_PARAM = 1.0
COST_CENTER = 4.0

N_CLASS = 2        # classification logits per query
N_PARAM = 3        # plane params per query / target
N_CENTER = 2       # center coords per query / target
PRED_FEATS = 8     # (l0, l1, px, py, pz, cx, cy, pad) fused feature-major slab
TGT_FEATS = 8      # (label, px, py, pz, cx, cy, pad, pad)
LANE = 128
SUBLANE = 8

# Tiling / VMEM policy, sized for the most constrained chip (v7x: 64 MiB
# physical VMEM, 32 MiB scoped default) while still allowing wide tiles on
# v5e/v6e (128 MiB physical).
MAX_TILE_T = 512               # sublane tile over targets
MAX_TILE_N = 2048              # lane tile over predictions (>=512 is ~85-86% of roofline)
VMEM_BUDGET_BYTES = 24 << 20   # working-set budget for all double-buffered blocks
VMEM_LIMIT_BYTES = 48 << 20    # scoped limit handed to Mosaic (> budget, < v7x physical)


def _round_up(x, m):
    return (x + m - 1) // m * m


def _split_dim(size, align, max_tile):
    """Pad `size` to `align`, split into equal tiles of at most `max_tile`
    (each a multiple of `align`).  Keeps the total padding overshoot < align
    per tile instead of < max_tile.  Returns (tile, padded_total)."""
    padded = _round_up(size, align)
    num_tiles = -(-padded // max_tile)
    tile = _round_up(-(-padded // num_tiles), align)
    return tile, tile * num_tiles


def _cost_kernel_t(pred_ref, tgt_ref, c_ref, *, w_class, w_param, w_center):
    """One [tile_t, tile_n] tile of the TRANSPOSED cost matrix C^T.

    C^T[j, i] = w_param * L1(param_i, tgt_param_j)
              - w_class * prob_i[tgt_label_j]
              + w_center * L2(center_i, tgt_center_j)

    pred_ref : [8, tile_n]       f32 feature-major (l0, l1, px, py, pz, cx, cy, pad)
    tgt_ref  : [tile_t, 8]       f32 (label, px, py, pz, cx, cy, pad, pad)
    c_ref    : [tile_t, tile_n]  f32, predictions lane-dense -> unmasked full stores
    """
    pred = pred_ref[...]
    tgt = tgt_ref[...]

    # --- specialized 2-class softmax, computed on the small [1, tile_n] rows ---
    l0 = pred[0:1, :]
    l1 = pred[1:2, :]
    m = jnp.maximum(l0, l1)
    e0 = jnp.exp(l0 - m)
    e1 = jnp.exp(l1 - m)
    # exact divide (approx reciprocal would eat into the 1e-5 reference
    # tolerance); fold cost_class's -w_class into the small pre-broadcast rows.
    neg_inv = (-w_class) / (e0 + e1)
    np0 = e0 * neg_inv            # [1, tile_n] == -w_class * prob(class 0)
    np1 = e1 * neg_inv            # [1, tile_n] == -w_class * prob(class 1)

    # --- cost_class = -w_class * out_prob[:, tgt_label]: 2-class gather as a
    # VPU select.  Labels were truncated to int in the wrapper (like .long());
    # labels outside {0, 1} fall back to class 0 instead of erroring like
    # torch advanced indexing would.
    is_cls1 = tgt[:, 0:1] == 1.0                     # [tile_t, 1]
    cost_class = jnp.where(is_cls1, np1, np0)        # [tile_t, tile_n]

    # --- cost_param = cdist(out_param, tgt_param, p=1) ---
    cost_param = (jnp.abs(pred[2:3, :] - tgt[:, 1:2])
                  + jnp.abs(pred[3:4, :] - tgt[:, 2:3])
                  + jnp.abs(pred[4:5, :] - tgt[:, 3:4]))
    if w_param != 1.0:            # static; elided for the module's w_param == 1
        cost_param = w_param * cost_param

    # --- cost_center = w_center * cdist(out_center, tgt_center, p=2) ---
    # w_center (== 4, a power of two, >= 0) is folded into the small
    # pre-broadcast operands: sqrt((w*dx)^2 + (w*dy)^2) == w * sqrt(dx^2+dy^2),
    # saving a full-size [tile_t, tile_n] multiply per tile.
    dx = w_center * pred[5:6, :] - w_center * tgt[:, 4:5]
    dy = w_center * pred[6:7, :] - w_center * tgt[:, 5:6]
    cost_center = jnp.sqrt(dx * dx + dy * dy)        # sqrt sits in the EUP slot

    c_ref[...] = cost_param + cost_class + cost_center


def compute_cost_matrix_transposed(pred_logits, pred_param, pred_center, tgt_all):
    """pred_*: [bs, Q, .]; tgt_all: [T, 6] = [label, param(3), center(2)].

    Returns the PADDED, TRANSPOSED cost matrix C^T of shape [t_pad, n_pad]
    (float32 device array), with n = bs*Q lane-dense.  The caller crops to
    [:T, :n] and transposes on the host: the matrix is device_get'd for scipy
    immediately anyway, and a device-side crop would cost a full extra HBM
    read+write of the whole cost matrix.
    """
    bs, q, n_class = pred_logits.shape
    assert n_class == N_CLASS, "kernel specializes the 2-class softmax/gather"
    assert COST_CENTER >= 0.0
    n = bs * q
    t = int(tgt_all.shape[0])
    assert t > 0, "empty-target case is handled by the caller"

    # Targets on sublanes (pad to 8), predictions on lanes (pad to 128).
    tile_t, t_pad = _split_dim(t, SUBLANE, MAX_TILE_T)

    # Lane tile over predictions from the VMEM working-set budget:
    #   2 * tile_t*tile_n*4 (output) + 2 * 8*tile_n*4 (pred) + 2 * tile_t*8*4 (tgt)
    avail = VMEM_BUDGET_BYTES - 2 * tile_t * TGT_FEATS * 4
    per_lane = (2 * tile_t + 2 * PRED_FEATS) * 4
    tile_n_cap = max(LANE, min(MAX_TILE_N, avail // per_lane // LANE * LANE))
    tile_n, n_pad = _split_dim(n, LANE, tile_n_cap)

    # Fused feature-major prediction slab [8, n_pad]: one input, one DMA stream.
    pred = jnp.concatenate(
        [pred_logits.reshape(n, N_CLASS).astype(jnp.float32),
         pred_param.reshape(n, N_PARAM).astype(jnp.float32),
         pred_center.reshape(n, N_CENTER).astype(jnp.float32)],
        axis=-1)                                                        # [n, 7]
    pred = jnp.pad(pred, ((0, n_pad - n), (0, PRED_FEATS - pred.shape[1]))).T

    # Fused target slab [t_pad, 8]: labels truncated to int (like tensor.long())
    # then stored back as f32 so the kernel's ==1.0 select matches torch gather.
    tgt_all = tgt_all.astype(jnp.float32)
    labels = tgt_all[:, 0].astype(jnp.int32).astype(jnp.float32)[:, None]
    tgt = jnp.concatenate([labels, tgt_all[:, 1:1 + N_PARAM + N_CENTER]], axis=-1)
    tgt = jnp.pad(tgt, ((0, t_pad - t), (0, TGT_FEATS - tgt.shape[1])))

    kernel = functools.partial(_cost_kernel_t, w_class=COST_CLASS,
                               w_param=COST_PARAM, w_center=COST_CENTER)

    # TODO(synk): on v7x, pltpu.CORE_PARALLEL on the N grid axis (or a core_map)
    # would explicitly shard tiles across the two TensorCores; kept "parallel"
    # here so the same kernel runs on single-core v5e/v6e parts.
    return pl.pallas_call(
        kernel,
        out_shape=jax.ShapeDtypeStruct((t_pad, n_pad), jnp.float32),
        grid=(t_pad // tile_t, n_pad // tile_n),
        in_specs=[
            pl.BlockSpec((PRED_FEATS, tile_n), lambda j, i: (0, i)),   # pred slab
            pl.BlockSpec((tile_t, TGT_FEATS), lambda j, i: (j, 0)),    # tgt slab
        ],
        out_specs=pl.BlockSpec((tile_t, tile_n), lambda j, i: (j, i)),
        compiler_params=pltpu.CompilerParams(
            dimension_semantics=("parallel", "parallel"),
            vmem_limit_bytes=VMEM_LIMIT_BYTES),
    )(pred, tgt)


def hungarian_matcher_debug(outputs, targets):
    """Mirrors HungarianMatcher_DEBUG.forward.

    outputs: dict with 'pred_logits' [bs,Q,2], 'pred_param' [bs,Q,3],
             'pred_center' [bs,Q,2]
    targets: list (len bs) of arrays [num_targets_b, 6] = [label, param(3), center(2)]
    Returns: (list of per-batch (index_i, index_j) int64 tuples, C as numpy [bs,Q,T])
    """
    bs, q = outputs['pred_logits'].shape[:2]
    n = bs * q
    sizes = [int(tgt.shape[0]) for tgt in targets]
    total_t = sum(sizes)

    if total_t == 0:
        c_np = np.zeros((bs, q, 0), np.float32)
    else:
        tgt_all = jnp.concatenate([jnp.asarray(tgt) for tgt in targets], axis=0)
        c_t_pad = compute_cost_matrix_transposed(
            outputs['pred_logits'], outputs['pred_param'],
            outputs['pred_center'], tgt_all)
        c_t_pad = jax.block_until_ready(c_t_pad)
        # Crop padding + transpose + restore [bs, Q, T] on the HOST: the matrix
        # is device_get'd for scipy anyway, avoiding ~2x device HBM traffic.
        c_t_np = np.asarray(jax.device_get(c_t_pad))
        c_np = np.ascontiguousarray(c_t_np[:total_t, :n].T).reshape(bs, q, total_t)

    offsets = np.cumsum([0] + sizes)

    # TODO(synk): linear_sum_assignment (Hungarian) is a sequential,
    # data-dependent host algorithm with no clean Pallas equivalent; it stays
    # on the host (scipy).
    try:
        from scipy.optimize import linear_sum_assignment
    except ImportError:
        linear_sum_assignment = None
        warnings.warn("scipy unavailable: falling back to a GREEDY matcher, "
                      "which is NOT an optimal Hungarian assignment")

    results = []
    for b in range(len(targets)):
        block = c_np[b][:, offsets[b]:offsets[b + 1]]
        if block.shape[1] == 0:
            results.append((np.zeros((0,), np.int64), np.zeros((0,), np.int64)))
            continue
        if linear_sum_assignment is not None:
            i, j = linear_sum_assignment(block)
        else:
            # degraded-mode greedy matching (suboptimal; see warning above)
            i, j, used = [], [], set()
            for col in range(block.shape[1]):
                for r in np.argsort(block[:, col]):
                    if r not in used:
                        used.add(int(r)); i.append(int(r)); j.append(col)
                        break
        results.append((np.asarray(i, dtype=np.int64),
                        np.asarray(j, dtype=np.int64)))
    return results, c_np


def _reference_cost(outputs, targets):
    """Pure numpy re-implementation of the PyTorch cost-matrix math."""
    logits = np.asarray(outputs['pred_logits'], np.float32)
    params = np.asarray(outputs['pred_param'], np.float32)
    centers = np.asarray(outputs['pred_center'], np.float32)
    bs, q, _ = logits.shape
    n = bs * q

    flat_logits = logits.reshape(n, -1)
    e = np.exp(flat_logits - flat_logits.max(-1, keepdims=True))
    out_prob = e / e.sum(-1, keepdims=True)
    out_param = params.reshape(n, -1)
    out_center = centers.reshape(n, -1)

    tgt_all = np.concatenate([np.asarray(t, np.float32) for t in targets], axis=0)
    tgt_ids = tgt_all[:, 0].astype(np.int64)
    tgt_param = tgt_all[:, 1:4]
    tgt_center = tgt_all[:, 4:6]

    cost_class = -out_prob[:, tgt_ids]
    cost_param = np.abs(out_param[:, None, :] - tgt_param[None, :, :]).sum(-1)
    cost_center = np.sqrt(((out_center[:, None, :] - tgt_center[None, :, :]) ** 2).sum(-1))
    c = COST_PARAM * cost_param + COST_CLASS * cost_class + COST_CENTER * cost_center
    return c.reshape(bs, q, -1)


if __name__ == "__main__":
    key = jax.random.PRNGKey(0)
    bs, num_queries = 2, 8
    sizes = [3, 5]  # num target planes per batch element

    k1, k2, k3, k4, _, _ = jax.random.split(key, 6)
    outputs = {
        'pred_logits': jax.random.normal(k1, (bs, num_queries, N_CLASS), jnp.float32),
        'pred_param':  jax.random.normal(k2, (bs, num_queries, N_PARAM), jnp.float32),
        'pred_center': jax.random.uniform(k3, (bs, num_queries, N_CENTER), jnp.float32),
    }

    targets = []
    tkeys = jax.random.split(k4, bs)
    for b, sz in enumerate(sizes):
        ka, kb, kc = jax.random.split(tkeys[b], 3)
        labels = jax.random.randint(ka, (sz, 1), 0, N_CLASS).astype(jnp.float32)
        t_param = jax.random.normal(kb, (sz, N_PARAM), jnp.float32)
        t_center = jax.random.uniform(kc, (sz, N_CENTER), jnp.float32)
        targets.append(jnp.concatenate([labels, t_param, t_center], axis=-1))  # [sz, 6]

    indices, c_kernel = hungarian_matcher_debug(outputs, targets)

    # correctness check against a pure-numpy reference of the PyTorch math
    c_ref = _reference_cost(outputs, targets)
    np.testing.assert_allclose(c_kernel, c_ref, rtol=1e-5, atol=1e-5)

    # sanity: each batch element has min(Q, sizes[b]) matches
    for b, (i, j) in enumerate(indices):
        assert len(i) == len(j) == min(num_queries, sizes[b])

    print("KERNEL_OK")
</pallas_src>

<mosaic_0001>
module attributes {stable_mosaic.version = 11 : i64} {
  func.func @_cost_kernel_t(%arg0: i32, %arg1: i32, %arg2: memref<8x128xf32, #tpu.memory_space<vmem>>, %arg3: memref<8x8xf32, #tpu.memory_space<vmem>>, %arg4: memref<8x128xf32, #tpu.memory_space<vmem>>) attributes {dimension_semantics = [#tpu.dimension_semantics<parallel>, #tpu.dimension_semantics<parallel>], iteration_bounds = array<i64: 1, 1>, scalar_prefetch = 0 : i64, scratch_operands = 0 : i64, tpu.core_type = #tpu.core_type<tc>, window_params = [{transform_indices = @transform_0, window_bounds = array<i64: 8, 128>}, {transform_indices = @transform_1, window_bounds = array<i64: 8, 8>}, {transform_indices = @transform_2, window_bounds = array<i64: 8, 128>}]} {
    %c0 = arith.constant 0 : index
    %c0_0 = arith.constant 0 : index
    %0 = vector.load %arg2[%c0, %c0_0] : memref<8x128xf32, #tpu.memory_space<vmem>>, vector<8x128xf32>
    %c0_1 = arith.constant 0 : index
    %c0_2 = arith.constant 0 : index
    %1 = vector.load %arg3[%c0_1, %c0_2] : memref<8x8xf32, #tpu.memory_space<vmem>>, vector<8x8xf32>
    %2 = vector.extract_strided_slice %0 {offsets = [0, 0], sizes = [1, 128], strides = [1, 1]} : vector<8x128xf32> to vector<1x128xf32>
    %3 = vector.extract_strided_slice %0 {offsets = [1, 0], sizes = [1, 128], strides = [1, 1]} : vector<8x128xf32> to vector<1x128xf32>
    %4 = arith.maximumf %2, %3 : vector<1x128xf32>
    %5 = arith.subf %2, %4 : vector<1x128xf32>
    %6 = math.exp %5 : vector<1x128xf32>
    %7 = arith.subf %3, %4 : vector<1x128xf32>
    %8 = math.exp %7 : vector<1x128xf32>
    %9 = arith.addf %6, %8 : vector<1x128xf32>
    %cst = arith.constant -1.000000e+00 : f32
    %10 = vector.broadcast %cst : f32 to vector<1x128xf32>
    %11 = arith.divf %10, %9 : vector<1x128xf32>
    %12 = arith.mulf %6, %11 : vector<1x128xf32>
    %13 = arith.mulf %8, %11 : vector<1x128xf32>
    %14 = vector.extract_strided_slice %1 {offsets = [0, 0], sizes = [8, 1], strides = [1, 1]} : vector<8x8xf32> to vector<8x1xf32>
    %cst_3 = arith.constant 1.000000e+00 : f32
    %15 = vector.broadcast %cst_3 : f32 to vector<8x1xf32>
    %16 = arith.cmpf oeq, %14, %15 : vector<8x1xf32>
    %17 = vector.shape_cast %16 : vector<8x1xi1> to vector<8x1xi1>
    %18 = vector.broadcast %17 : vector<8x1xi1> to vector<8x128xi1>
    %19 = vector.shape_cast %13 : vector<1x128xf32> to vector<1x128xf32>
    %20 = vector.broadcast %19 : vector<1x128xf32> to vector<8x128xf32>
    %21 = vector.shape_cast %12 : vector<1x128xf32> to vector<1x128xf32>
    %22 = vector.broadcast %21 : vector<1x128xf32> to vector<8x128xf32>
    %23 = arith.select %18, %20, %22 : vector<8x128xi1>, vector<8x128xf32>
    %24 = vector.extract_strided_slice %0 {offsets = [2, 0], sizes = [1, 128], strides = [1, 1]} : vector<8x128xf32> to vector<1x128xf32>
    %25 = vector.extract_strided_slice %1 {offsets = [0, 1], sizes = [8, 1], strides = [1, 1]} : vector<8x8xf32> to vector<8x1xf32>
    %26 = vector.broadcast %24 : vector<1x128xf32> to vector<8x128xf32>
    %27 = vector.broadcast %25 : vector<8x1xf32> to vector<8x128xf32>
    %28 = arith.subf %26, %27 : vector<8x128xf32>
    %29 = math.absf %28 : vector<8x128xf32>
    %30 = vector.extract_strided_slice %0 {offsets = [3, 0], sizes = [1, 128], strides = [1, 1]} : vector<8x128xf32> to vector<1x128xf32>
    %31 = vector.extract_strided_slice %1 {offsets = [0, 2], sizes = [8, 1], strides = [1, 1]} : vector<8x8xf32> to vector<8x1xf32>
    %32 = vector.broadcast %30 : vector<1x128xf32> to vector<8x128xf32>
    %33 = vector.broadcast %31 : vector<8x1xf32> to vector<8x128xf32>
    %34 = arith.subf %32, %33 : vector<8x128xf32>
    %35 = math.absf %34 : vector<8x128xf32>
    %36 = arith.addf %29, %35 : vector<8x128xf32>
    %37 = vector.extract_strided_slice %0 {offsets = [4, 0], sizes = [1, 128], strides = [1, 1]} : vector<8x128xf32> to vector<1x128xf32>
    %38 = vector.extract_strided_slice %1 {offsets = [0, 3], sizes = [8, 1], strides = [1, 1]} : vector<8x8xf32> to vector<8x1xf32>
    %39 = vector.broadcast %37 : vector<1x128xf32> to vector<8x128xf32>
    %40 = vector.broadcast %38 : vector<8x1xf32> to vector<8x128xf32>
    %41 = arith.subf %39, %40 : vector<8x128xf32>
    %42 = math.absf %41 : vector<8x128xf32>
    %43 = arith.addf %36, %42 : vector<8x128xf32>
    %44 = vector.extract_strided_slice %0 {offsets = [5, 0], sizes = [1, 128], strides = [1, 1]} : vector<8x128xf32> to vector<1x128xf32>
    %cst_4 = arith.constant 4.000000e+00 : f32
    %45 = vector.broadcast %cst_4 : f32 to vector<1x128xf32>
    %46 = arith.mulf %45, %44 : vector<1x128xf32>
    %47 = vector.extract_strided_slice %1 {offsets = [0, 4], sizes = [8, 1], strides = [1, 1]} : vector<8x8xf32> to vector<8x1xf32>
    %cst_5 = arith.constant 4.000000e+00 : f32
    %48 = vector.broadcast %cst_5 : f32 to vector<8x1xf32>
    %49 = arith.mulf %48, %47 : vector<8x1xf32>
    %50 = vector.broadcast %46 : vector<1x128xf32> to vector<8x128xf32>
    %51 = vector.broadcast %49 : vector<8x1xf32> to vector<8x128xf32>
    %52 = arith.subf %50, %51 : vector<8x128xf32>
    %53 = vector.extract_strided_slice %0 {offsets = [6, 0], sizes = [1, 128], strides = [1, 1]} : vector<8x128xf32> to vector<1x128xf32>
    %cst_6 = arith.constant 4.000000e+00 : f32
    %54 = vector.broadcast %cst_6 : f32 to vector<1x128xf32>
    %55 = arith.mulf %54, %53 : vector<1x128xf32>
    %56 = vector.extract_strided_slice %1 {offsets = [0, 5], sizes = [8, 1], strides = [1, 1]} : vector<8x8xf32> to vector<8x1xf32>
    %cst_7 = arith.constant 4.000000e+00 : f32
    %57 = vector.broadcast %cst_7 : f32 to vector<8x1xf32>
    %58 = arith.mulf %57, %56 : vector<8x1xf32>
    %59 = vector.broadcast %55 : vector<1x128xf32> to vector<8x128xf32>
    %60 = vector.broadcast %58 : vector<8x1xf32> to vector<8x128xf32>
    %61 = arith.subf %59, %60 : vector<8x128xf32>
    %62 = arith.mulf %52, %52 : vector<8x128xf32>
    %63 = arith.mulf %61, %61 : vector<8x128xf32>
    %64 = arith.addf %62, %63 : vector<8x128xf32>
    %65 = math.sqrt %64 : vector<8x128xf32>
    %66 = arith.addf %43, %23 : vector<8x128xf32>
    %67 = arith.addf %66, %65 : vector<8x128xf32>
    %c0_8 = arith.constant 0 : index
    %c0_9 = arith.constant 0 : index
    %68 = vector.load %arg4[%c0_8, %c0_9] : memref<8x128xf32, #tpu.memory_space<vmem>>, vector<8x128xf32>
    tpu.vector_store %arg4[%c0_8, %c0_9], %67 {strides = array<i32>} : memref<8x128xf32, #tpu.memory_space<vmem>>, vector<8x128xf32>,
    return
  }
  func.func @transform_0(%arg0: i32, %arg1: i32) -> (i32, i32) {
    %c0_i32 = arith.constant 0 : i32
    %c0_i32_0 = arith.constant 0 : i32
    return %c0_i32, %arg1 : i32, i32
  }
  func.func @transform_1(%arg0: i32, %arg1: i32) -> (i32, i32) {
    %c0_i32 = arith.constant 0 : i32
    %c0_i32_0 = arith.constant 0 : i32
    return %arg0, %c0_i32 : i32, i32
  }
  func.func @transform_2(%arg0: i32, %arg1: i32) -> (i32, i32) {
    %c0_i32 = arith.constant 0 : i32
    return %arg0, %arg1 : i32, i32
  }
}

</mosaic_0001>

<llo_original>
// kernel: tpu_custom_call.1
$region0: #{tpu_custom_call.1}
  #allocation0 [shape = 'u32[]', space=smem, size = 0x4, offset = 0x4, fixed_abs, tag = 'smem constant byte address 0x4 - core index']
  #allocation1 [shape = 'u32[144,128]{1,0:T(1,128)}', space=vmem, size = 0x12000, scoped, tag = 'internal scratch']
  %s0 = inlined_call_operand.hbm [shape: f32[8,128], index: 0, kind: input, shape index: {}]
  %s1 = inlined_call_operand.hbm [shape: f32[8,8], index: 1, kind: input, shape index: {}]
  %s2 = inlined_call_operand.hbm [shape: f32[8,128], index: 2, kind: output, shape index: {}]
  %s3 = sld [smem:[#allocation0]]
  $region26: #{tpu_custom_call.1} parent=0
    _
  %s5 = ssub.s32 1, %s3
  %s6 = scalar_select 0, %s5, %s3
  $region1: #{tpu_custom_call.1} parent=0
    #allocation2 [shape = 'u8[4096]{0}', space=vmem, size = 0x1000, scoped, tag = 'input window, operand 0, single buffered']
    #allocation3 [shape = 's32[1]{0}', space=sflag, size = 0x4, scoped, tag = 'scoped memory for tpu_custom_call.1']
    #allocation4 [shape = 's32[1]{0}', space=sflag, size = 0x4, scoped, tag = 'scoped memory for tpu_custom_call.1']
    #allocation5 [shape = 'u8[4096]{0}', space=vmem, size = 0x1000, scoped, tag = 'input window, operand 1, single buffered']
    #allocation6 [shape = 's32[1]{0}', space=sflag, size = 0x4, scoped, tag = 'scoped memory for tpu_custom_call.1']
    #allocation7 [shape = 'u8[4096]{0}', space=vmem, size = 0x1000, scoped, tag = 'output window, operand 0, single buffered']
    %7 = vsyncpa [#allocation3], 0
    %8 = vsyncpa [#allocation6], 0
    %9 = vsyncpa [#allocation4], 0
    // Predicated region
    $region2: #{tpu_custom_call.1} parent=1 // pred_check
      _
    $region3: #{tpu_custom_call.1} parent=1 // pred_check_branch
      %11 = sbr.rel (0) target = $region5
    $region4: #{tpu_custom_call.1} parent=1 // pred_region
      %s13 = ssub.s32 128, 128
      %14 = vsyncadd [#allocation3], %s13
      %s16 = sshll.u32 [#allocation2], 4
      %s17 = int_to_ptr.vmem [resolvable:$true] %s16
      %19 = dma.hbm_to_vmem [thread:$0]  %s0, 128, %s17, [#allocation3]
    $region5: #{tpu_custom_call.1} parent=1 // pred_fallthru
      _
    // Predicated region
    $region6: #{tpu_custom_call.1} parent=1 // pred_check
      _
    $region7: #{tpu_custom_call.1} parent=1 // pred_check_branch
      %21 = sbr.rel (0) target = $region9
    $region8: #{tpu_custom_call.1} parent=1 // pred_region
      %s23 = ssub.s32 128, 128
      %24 = vsyncadd [#allocation6], %s23
      %s26 = sshll.u32 [#allocation5], 4
      %s27 = int_to_ptr.vmem [resolvable:$true] %s26
      %29 = dma.hbm_to_vmem [thread:$0]  %s1, 128, %s27, [#allocation6]
    $region9: #{tpu_custom_call.1} parent=1 // pred_fallthru
      _
    // Predicated region
    $region10: #{tpu_custom_call.1} parent=1 // pred_check
      _
    $region11: #{tpu_custom_call.1} parent=1 // pred_check_branch
      %31 = sbr.rel (0) target = $region13
    $region12: #{tpu_custom_call.1} parent=1 // pred_region
      %32 = dma.done [#allocation3], 128
    $region13: #{tpu_custom_call.1} parent=1 // pred_fallthru
      _
    // Predicated region
    $region14: #{tpu_custom_call.1} parent=1 // pred_check
      _
    $region15: #{tpu_custom_call.1} parent=1 // pred_check_branch
      %34 = sbr.rel (0) target = $region17
    $region16: #{tpu_custom_call.1} parent=1 // pred_region
      %35 = dma.done [#allocation6], 128
    $region17: #{tpu_custom_call.1} parent=1 // pred_fallthru
      _
    %v36 = vld [vmem:[#allocation2] sm:$0xff]
    %v37 = vld [vmem:[#allocation5] sm:$0xff]
    %v39 = vrot.slane %v36, 1
    %v41 = vmax.f32 %v36, %v39
    %v42 = vsub.f32 %v36, %v41
    %v43 = vmul.f32 %v42, 1.442695
    %v44 = vpow.pop %v43
    %v46 = vrot.slane %v41, 7
    %v48 = vsub.f32 %v36, %v46
    %v49 = vmul.f32 %v48, 1.442695
    %v50 = vpow.pop %v49
    %v52 = vrot.slane %v50, 1
    %v54 = vadd.f32 %v44, %v52
    %v55 = vrcp.pop %v54
    %v56 = vmul.f32 -1.0, %v55
    %v57 = vmul.f32 %v44, %v56
    %v59 = vrot.slane %v56, 7
    %v61 = vmul.f32 %v50, %v59
    %vm62 = vcmp.eq.f32.partialorder %v37, 1.0
    %v63 = vsel %vm62, 1, 0
    %64 = vset.pattern.permute.xlu0 0
    %65 = vperm.xlu0 %64, %v63
    %v66 = vpop.permute.xlu0 %65
    %vm67 = vcmp.eq.s32.totalorder %v66, 1
    %v68 = vlaneseq
    %v69 = vshrl.u32 %v68, 7
    %v70 = vsub.s32 1, %v69
    %v71 = vrot.slane %v61, %v70
    %v72 = vlaneseq
    %v73 = vshrl.u32 %v72, 7
    %v74 = vsub.s32 0, %v73
    %v75 = vrot.slane %v57, %v74
    %v76 = vsel %vm67, %v71, %v75
    %v77 = vlaneseq
    %v78 = vshrl.u32 %v77, 7
    %v79 = vsub.s32 2, %v78
    %v80 = vrot.slane %v36, %v79
    %82 = vset.pattern.permute.xlu0 1
    %83 = vperm.xlu0 %82, %v37
    %v84 = vpop.permute.xlu0 %83
    %v86 = vsub.f32 %v80, %v84
    %v87 = vand.u32 2147483647, %v86
    %v88 = vlaneseq
    %v89 = vshrl.u32 %v88, 7
    %v90 = vsub.s32 3, %v89
    %v91 = vrot.slane %v36, %v90
    %92 = vset.pattern.permute.xlu0 2
    %93 = vperm.xlu0 %92, %v37
    %v94 = vpop.permute.xlu0 %93
    %v96 = vsub.f32 %v91, %v94
    %v97 = vand.u32 2147483647, %v96
    %v98 = vadd.f32 %v87, %v97
    %v99 = vlaneseq
    %v100 = vshrl.u32 %v99, 7
    %v101 = vsub.s32 4, %v100
    %v102 = vrot.slane %v36, %v101
    %103 = vset.pattern.permute.xlu0 3
    %104 = vperm.xlu0 %103, %v37
    %v105 = vpop.permute.xlu0 %104
    %v107 = vsub.f32 %v102, %v105
    %v108 = vand.u32 2147483647, %v107
    %v109 = vadd.f32 %v98, %v108
    %v110 = vmul.f32 %v36, 4.0
    %v111 = vmul.f32 %v37, 4.0
    %v112 = vlaneseq
    %v113 = vshrl.u32 %v112, 7
    %v114 = vsub.s32 5, %v113
    %v115 = vrot.slane %v110, %v114
    %117 = vset.pattern.permute.xlu0 4
    %118 = vperm.xlu0 %117, %v111
    %v119 = vpop.permute.xlu0 %118
    %v121 = vsub.f32 %v115, %v119
    %v122 = vlaneseq
    %v123 = vshrl.u32 %v122, 7
    %v124 = vsub.s32 6, %v123
    %v125 = vrot.slane %v110, %v124
    %126 = vset.pattern.permute.xlu0 5
    %127 = vperm.xlu0 %126, %v111
    %v128 = vpop.permute.xlu0 %127
    %v130 = vsub.f32 %v125, %v128
    %v131 = vmul.f32 %v121, %v121
    %v132 = vmul.f32 %v130, %v130
    %v133 = vadd.f32 %v131, %v132
    %v134 = vrsqrt.pop %v133
    %v135 = vmul.f32 %v133, %v134
    %vm136 = vcmp.eq.f32.partialorder %v133, inf
    %v137 = vsel %vm136, %v133, %v135
    %vm138 = vcmp.eq.f32.partialorder %v133, 0.0
    %v139 = vand.u32 %v133, 2147483648
    %v140 = vsel %vm138, %v139, %v137
    %v141 = vadd.f32 %v109, %v76
    %v142 = vadd.f32 %v141, %v140
    %143 = vst [vmem:[#allocation7] sm:$0xff] %v142
    // Predicated region
    $region18: #{tpu_custom_call.1} parent=1 // pred_check
      _
    $region19: #{tpu_custom_call.1} parent=1 // pred_check_branch
      %145 = sbr.rel (0) target = $region21
    $region20: #{tpu_custom_call.1} parent=1 // pred_region
      %s147 = ssub.s32 128, 128
      %148 = vsyncadd [#allocation4], %s147
      %s150 = sshll.u32 [#allocation7], 4
      %s151 = int_to_ptr.vmem [resolvable:$true] %s150
      %153 = dma.vmem_to_hbm [thread:$0]  %s151, 128, %s2, [#allocation4]
    $region21: #{tpu_custom_call.1} parent=1 // pred_fallthru
      _
    // Predicated region
    $region22: #{tpu_custom_call.1} parent=1 // pred_check
      _
    $region23: #{tpu_custom_call.1} parent=1 // pred_check_branch
      %155 = sbr.rel (0) target = $region25
    $region24: #{tpu_custom_call.1} parent=1 // pred_region
      %156 = dma.done [#allocation4], 128
    $region25: #{tpu_custom_call.1} parent=1 // pred_fallthru
      _
    %157 = vsyncpa [#allocation3], 1
    %158 = vsyncpa [#allocation6], 1
    %159 = vsyncpa [#allocation4], 1

</llo_original>
